<compile_context>
chip_gen: v6e
topology: v6e:2x2x1
jax: 0.10.0
libtpu: 0.0.40
codegen_flags: <defaults>
</compile_context>

<pallas_src>
import functools

import jax
import jax.numpy as jnp
from jax.experimental import pallas as pl
from jax.experimental.pallas import tpu as pltpu

EPS = 1e-5
MOMENTUM = 0.1


def _round_up(v, m):
    return (v + m - 1) // m * m


def _choose_tile_f(n, f):
    """Feature-tile width: multiple of 128, sized so the double-buffered x and y
    tiles (2x in + 2x out, f32) stay under ~12 MiB (fits v5e's 16 MiB default
    scoped VMEM; comfortably inside v6e/v7x defaults)."""
    budget_bytes = 12 << 20
    bytes_per_lane_col = 4 * n * 4          # 4 buffers * N rows * 4 B
    max_tile = max(128, (budget_bytes // bytes_per_lane_col) // 128 * 128)
    # TODO(synk): add a trailing N-reduction grid axis (sum / sum-of-squares
    # scratch + pl.when finalize) for batches so large that even a 128-wide
    # feature tile overflows VMEM.
    tile = min(_round_up(f, 128), 2048, max_tile)
    return max(tile, 128)


def _bn_train_kernel(x_ref, gamma_ref, beta_ref, mu_ref, sigma_ref,
                     y_ref, new_mu_ref, new_sigma_ref, *, eps, momentum):
    # Per-feature-tile body. Everything in f32 (matches torch default f32).
    x = x_ref[...].astype(jnp.float32)                       # (N, TILE_F)
    gamma = gamma_ref[...].astype(jnp.float32)                # (1, TILE_F)
    beta = beta_ref[...].astype(jnp.float32)                  # (1, TILE_F)
    mu = mu_ref[...].astype(jnp.float32)                      # (1, TILE_F)
    sigma = sigma_ref[...].astype(jnp.float32)                # (1, TILE_F)

    # Batch statistics (dim=0, keepdim=True), biased variance (unbiased=False),
    # exactly as in the PyTorch module.
    mean = jnp.mean(x, axis=0, keepdims=True)                 # (1, TILE_F)
    diff = x - mean
    var = jnp.mean(diff * diff, axis=0, keepdims=True)        # (1, TILE_F)

    # Running-stat update: mu = (1-m)*mu + m*mean ; sigma = (1-m)*sigma + m*var
    new_mu_ref[...] = ((1.0 - momentum) * mu + momentum * mean).astype(new_mu_ref.dtype)
    new_sigma_ref[...] = ((1.0 - momentum) * sigma + momentum * var).astype(new_sigma_ref.dtype)

    # Fold normalize + affine into per-feature scale/shift (2 VPU ops/elem).
    scale = gamma * jax.lax.rsqrt(var + eps)                  # (1, TILE_F)
    shift = beta - mean * scale                               # (1, TILE_F)
    y_ref[...] = (x * scale + shift).astype(y_ref.dtype)


def _bn_eval_kernel(x_ref, gamma_ref, beta_ref, mu_ref, sigma_ref,
                    y_ref, *, eps):
    x = x_ref[...].astype(jnp.float32)
    gamma = gamma_ref[...].astype(jnp.float32)
    beta = beta_ref[...].astype(jnp.float32)
    mean = mu_ref[...].astype(jnp.float32)
    var = sigma_ref[...].astype(jnp.float32)
    scale = gamma * jax.lax.rsqrt(var + eps)
    shift = beta - mean * scale
    y_ref[...] = (x * scale + shift).astype(y_ref.dtype)


def batchnorm_forward(x, gamma, beta, mu, sigma, *, training=True,
                      eps=EPS, momentum=MOMENTUM):
    """Pallas BatchNorm forward.

    training=True  -> returns (y, new_mu, new_sigma)
    training=False -> returns y
    Shapes: x (N, F); gamma/beta/mu/sigma (1, F).
    """
    n, f = x.shape
    tile_f = _choose_tile_f(n, f)
    f_pad = _round_up(f, tile_f)
    pad = f_pad - f

    if pad:
        # Pad the feature axis to a lane-dense multiple of the tile width.
        # Padded columns are computed but sliced off afterwards; pad values are
        # chosen so nothing blows up (var+eps > 0 always).
        x_p = jnp.pad(x, ((0, 0), (0, pad)))
        gamma_p = jnp.pad(gamma, ((0, 0), (0, pad)), constant_values=1.0)
        beta_p = jnp.pad(beta, ((0, 0), (0, pad)))
        mu_p = jnp.pad(mu, ((0, 0), (0, pad)))
        sigma_p = jnp.pad(sigma, ((0, 0), (0, pad)), constant_values=1.0)
    else:
        x_p, gamma_p, beta_p, mu_p, sigma_p = x, gamma, beta, mu, sigma

    grid = (f_pad // tile_f,)
    x_spec = pl.BlockSpec((n, tile_f), lambda j: (0, j))
    vec_spec = pl.BlockSpec((1, tile_f), lambda j: (0, j))
    in_specs = [x_spec, vec_spec, vec_spec, vec_spec, vec_spec]
    compiler_params = pltpu.CompilerParams(dimension_semantics=("parallel",))

    if training:
        kernel = functools.partial(_bn_train_kernel, eps=eps, momentum=momentum)
        out_shape = (
            jax.ShapeDtypeStruct((n, f_pad), x.dtype),
            jax.ShapeDtypeStruct((1, f_pad), mu.dtype),
            jax.ShapeDtypeStruct((1, f_pad), sigma.dtype),
        )
        out_specs = (x_spec, vec_spec, vec_spec)
        y_p, new_mu_p, new_sigma_p = pl.pallas_call(
            kernel,
            out_shape=out_shape,
            grid=grid,
            in_specs=in_specs,
            out_specs=out_specs,
            # mu -> new_mu, sigma -> new_sigma updated in place (when donated).
            input_output_aliases={3: 1, 4: 2},
            compiler_params=compiler_params,
        )(x_p, gamma_p, beta_p, mu_p, sigma_p)
        if pad:
            return y_p[:, :f], new_mu_p[:, :f], new_sigma_p[:, :f]
        return y_p, new_mu_p, new_sigma_p

    kernel = functools.partial(_bn_eval_kernel, eps=eps)
    y_p = pl.pallas_call(
        kernel,
        out_shape=jax.ShapeDtypeStruct((n, f_pad), x.dtype),
        grid=grid,
        in_specs=in_specs,
        out_specs=x_spec,
        compiler_params=compiler_params,
    )(x_p, gamma_p, beta_p, mu_p, sigma_p)
    return y_p[:, :f] if pad else y_p


def _ref_forward(x, gamma, beta, mu, sigma, *, training, eps=EPS, momentum=MOMENTUM):
    """Pure-JAX reference matching the PyTorch module."""
    if training:
        mean = jnp.mean(x, axis=0, keepdims=True)
        var = jnp.mean((x - mean) ** 2, axis=0, keepdims=True)
        new_mu = (1 - momentum) * mu + momentum * mean
        new_sigma = (1 - momentum) * sigma + momentum * var
    else:
        mean, var = mu, sigma
        new_mu, new_sigma = mu, sigma
    z = (x - mean) / jnp.sqrt(var + eps)
    y = gamma * z + beta
    return y, new_mu, new_sigma


def _run_case(key, batch, num_features):
    x = jax.random.normal(key, (batch, num_features), dtype=jnp.float32)

    # Deterministic parameter / buffer init, identical to the module's __init__.
    beta = jnp.zeros((1, num_features), dtype=jnp.float32)
    gamma = jnp.ones((1, num_features), dtype=jnp.float32)
    mu = jnp.zeros((1, num_features), dtype=jnp.float32)
    sigma = jnp.ones((1, num_features), dtype=jnp.float32)

    # Pure-JAX references (computed up front).
    y_ref, mu_after_ref, sigma_after_ref = _ref_forward(
        x, gamma, beta, mu, sigma, training=True)

    # Training-mode forward (batch stats + running-stat update).
    y, new_mu, new_sigma = batchnorm_forward(x, gamma, beta, mu, sigma, training=True)
    jax.block_until_ready((y, new_mu, new_sigma))

    # Eval-mode forward (uses the updated running stats).
    y_eval = batchnorm_forward(x, gamma, beta, new_mu, new_sigma, training=False)
    jax.block_until_ready(y_eval)
    y_eval_ref, _, _ = _ref_forward(
        x, gamma, beta, mu_after_ref, sigma_after_ref, training=False)

    assert jnp.allclose(y, y_ref, atol=1e-5, rtol=1e-5)
    assert jnp.allclose(new_mu, mu_after_ref, atol=1e-6, rtol=1e-6)
    assert jnp.allclose(new_sigma, sigma_after_ref, atol=1e-6, rtol=1e-6)
    assert jnp.allclose(y_eval, y_eval_ref, atol=1e-5, rtol=1e-5)


if __name__ == "__main__":
    key = jax.random.PRNGKey(0)
    k0, k1 = jax.random.split(key)
    # Small shape matching the module's demo (exercises F-padding to one tile).
    _run_case(k0, batch=8, num_features=32)
    # Non-128-multiple F large enough to span multiple feature tiles after padding.
    _run_case(k1, batch=8, num_features=200)
    print("KERNEL_OK")
</pallas_src>

<mosaic_0001>
module attributes {stable_mosaic.version = 11 : i64} {
  func.func @_bn_train_kernel(%arg0: i32, %arg1: memref<8x128xf32, #tpu.memory_space<vmem>>, %arg2: memref<1x128xf32, #tpu.memory_space<vmem>>, %arg3: memref<1x128xf32, #tpu.memory_space<vmem>>, %arg4: memref<1x128xf32, #tpu.memory_space<vmem>>, %arg5: memref<1x128xf32, #tpu.memory_space<vmem>>, %arg6: memref<8x128xf32, #tpu.memory_space<vmem>>, %arg7: memref<1x128xf32, #tpu.memory_space<vmem>>, %arg8: memref<1x128xf32, #tpu.memory_space<vmem>>) attributes {dimension_semantics = [#tpu.dimension_semantics<parallel>], iteration_bounds = array<i64: 1>, scalar_prefetch = 0 : i64, scratch_operands = 0 : i64, tpu.core_type = #tpu.core_type<tc>, window_params = [{transform_indices = @transform_0, window_bounds = array<i64: 8, 128>}, {transform_indices = @transform_1, window_bounds = array<i64: 1, 128>}, {transform_indices = @transform_2, window_bounds = array<i64: 1, 128>}, {transform_indices = @transform_3, window_bounds = array<i64: 1, 128>}, {transform_indices = @transform_4, window_bounds = array<i64: 1, 128>}, {transform_indices = @transform_5, window_bounds = array<i64: 8, 128>}, {transform_indices = @transform_6, window_bounds = array<i64: 1, 128>}, {transform_indices = @transform_7, window_bounds = array<i64: 1, 128>}]} {
    %c0 = arith.constant 0 : index
    %c0_0 = arith.constant 0 : index
    %0 = vector.load %arg1[%c0, %c0_0] : memref<8x128xf32, #tpu.memory_space<vmem>>, vector<8x128xf32>
    %c0_1 = arith.constant 0 : index
    %c0_2 = arith.constant 0 : index
    %1 = vector.load %arg2[%c0_1, %c0_2] : memref<1x128xf32, #tpu.memory_space<vmem>>, vector<1x128xf32>
    %c0_3 = arith.constant 0 : index
    %c0_4 = arith.constant 0 : index
    %2 = vector.load %arg3[%c0_3, %c0_4] : memref<1x128xf32, #tpu.memory_space<vmem>>, vector<1x128xf32>
    %c0_5 = arith.constant 0 : index
    %c0_6 = arith.constant 0 : index
    %3 = vector.load %arg4[%c0_5, %c0_6] : memref<1x128xf32, #tpu.memory_space<vmem>>, vector<1x128xf32>
    %c0_7 = arith.constant 0 : index
    %c0_8 = arith.constant 0 : index
    %4 = vector.load %arg5[%c0_7, %c0_8] : memref<1x128xf32, #tpu.memory_space<vmem>>, vector<1x128xf32>
    %cst = arith.constant dense<0.000000e+00> : vector<128xf32>
    %5 = vector.multi_reduction <add>, %0, %cst [0] : vector<8x128xf32> to vector<128xf32>
    %6 = vector.shape_cast %5 : vector<128xf32> to vector<1x128xf32>
    %cst_9 = arith.constant 8.000000e+00 : f32
    %7 = vector.broadcast %cst_9 : f32 to vector<1x128xf32>
    %8 = arith.divf %6, %7 : vector<1x128xf32>
    %9 = vector.broadcast %8 : vector<1x128xf32> to vector<8x128xf32>
    %10 = arith.subf %0, %9 : vector<8x128xf32>
    %11 = arith.mulf %10, %10 : vector<8x128xf32>
    %cst_10 = arith.constant dense<0.000000e+00> : vector<128xf32>
    %12 = vector.multi_reduction <add>, %11, %cst_10 [0] : vector<8x128xf32> to vector<128xf32>
    %13 = vector.shape_cast %12 : vector<128xf32> to vector<1x128xf32>
    %cst_11 = arith.constant 8.000000e+00 : f32
    %14 = vector.broadcast %cst_11 : f32 to vector<1x128xf32>
    %15 = arith.divf %13, %14 : vector<1x128xf32>
    %cst_12 = arith.constant 0.899999976 : f32
    %16 = vector.broadcast %cst_12 : f32 to vector<1x128xf32>
    %17 = arith.mulf %16, %3 : vector<1x128xf32>
    %cst_13 = arith.constant 1.000000e-01 : f32
    %18 = vector.broadcast %cst_13 : f32 to vector<1x128xf32>
    %19 = arith.mulf %18, %8 : vector<1x128xf32>
    %20 = arith.addf %17, %19 : vector<1x128xf32>
    %c0_14 = arith.constant 0 : index
    %c0_15 = arith.constant 0 : index
    %21 = vector.load %arg7[%c0_14, %c0_15] : memref<1x128xf32, #tpu.memory_space<vmem>>, vector<1x128xf32>
    tpu.vector_store %arg7[%c0_14, %c0_15], %20 {strides = array<i32>} : memref<1x128xf32, #tpu.memory_space<vmem>>, vector<1x128xf32>,
    %cst_16 = arith.constant 0.899999976 : f32
    %22 = vector.broadcast %cst_16 : f32 to vector<1x128xf32>
    %23 = arith.mulf %22, %4 : vector<1x128xf32>
    %cst_17 = arith.constant 1.000000e-01 : f32
    %24 = vector.broadcast %cst_17 : f32 to vector<1x128xf32>
    %25 = arith.mulf %24, %15 : vector<1x128xf32>
    %26 = arith.addf %23, %25 : vector<1x128xf32>
    %c0_18 = arith.constant 0 : index
    %c0_19 = arith.constant 0 : index
    %27 = vector.load %arg8[%c0_18, %c0_19] : memref<1x128xf32, #tpu.memory_space<vmem>>, vector<1x128xf32>
    tpu.vector_store %arg8[%c0_18, %c0_19], %26 {strides = array<i32>} : memref<1x128xf32, #tpu.memory_space<vmem>>, vector<1x128xf32>,
    %cst_20 = arith.constant 9.99999974E-6 : f32
    %28 = vector.broadcast %cst_20 : f32 to vector<1x128xf32>
    %29 = arith.addf %15, %28 : vector<1x128xf32>
    %30 = math.rsqrt %29 : vector<1x128xf32>
    %31 = arith.mulf %1, %30 : vector<1x128xf32>
    %32 = arith.mulf %8, %31 : vector<1x128xf32>
    %33 = arith.subf %2, %32 : vector<1x128xf32>
    %34 = vector.broadcast %31 : vector<1x128xf32> to vector<8x128xf32>
    %35 = arith.mulf %0, %34 : vector<8x128xf32>
    %36 = vector.broadcast %33 : vector<1x128xf32> to vector<8x128xf32>
    %37 = arith.addf %35, %36 : vector<8x128xf32>
    %c0_21 = arith.constant 0 : index
    %c0_22 = arith.constant 0 : index
    %38 = vector.load %arg6[%c0_21, %c0_22] : memref<8x128xf32, #tpu.memory_space<vmem>>, vector<8x128xf32>
    tpu.vector_store %arg6[%c0_21, %c0_22], %37 {strides = array<i32>} : memref<8x128xf32, #tpu.memory_space<vmem>>, vector<8x128xf32>,
    return
  }
  func.func @transform_0(%arg0: i32) -> (i32, i32) {
    %c0_i32 = arith.constant 0 : i32
    %c0_i32_0 = arith.constant 0 : i32
    return %c0_i32, %arg0 : i32, i32
  }
  func.func @transform_1(%arg0: i32) -> (i32, i32) {
    %c0_i32 = arith.constant 0 : i32
    %c0_i32_0 = arith.constant 0 : i32
    return %c0_i32, %arg0 : i32, i32
  }
  func.func @transform_2(%arg0: i32) -> (i32, i32) {
    %c0_i32 = arith.constant 0 : i32
    %c0_i32_0 = arith.constant 0 : i32
    return %c0_i32, %arg0 : i32, i32
  }
  func.func @transform_3(%arg0: i32) -> (i32, i32) {
    %c0_i32 = arith.constant 0 : i32
    %c0_i32_0 = arith.constant 0 : i32
    return %c0_i32, %arg0 : i32, i32
  }
  func.func @transform_4(%arg0: i32) -> (i32, i32) {
    %c0_i32 = arith.constant 0 : i32
    %c0_i32_0 = arith.constant 0 : i32
    return %c0_i32, %arg0 : i32, i32
  }
  func.func @transform_5(%arg0: i32) -> (i32, i32) {
    %c0_i32 = arith.constant 0 : i32
    %c0_i32_0 = arith.constant 0 : i32
    return %c0_i32, %arg0 : i32, i32
  }
  func.func @transform_6(%arg0: i32) -> (i32, i32) {
    %c0_i32 = arith.constant 0 : i32
    %c0_i32_0 = arith.constant 0 : i32
    return %c0_i32, %arg0 : i32, i32
  }
  func.func @transform_7(%arg0: i32) -> (i32, i32) {
    %c0_i32 = arith.constant 0 : i32
    %c0_i32_0 = arith.constant 0 : i32
    return %c0_i32, %arg0 : i32, i32
  }
}

</mosaic_0001>

<llo_original>
// kernel: tpu_custom_call.1
$region0: #{tpu_custom_call.1}
  #allocation0 [shape = 'u32[]', space=smem, size = 0x4, offset = 0x4, fixed_abs, tag = 'smem constant byte address 0x4 - core index']
  #allocation1 [shape = 'u32[144,128]{1,0:T(1,128)}', space=vmem, size = 0x12000, scoped, tag = 'internal scratch']
  %s0 = inlined_call_operand.vmem [shape: f32[8,128], index: 0, kind: input, shape index: {}]
  %s1 = inlined_call_operand.vmem [shape: f32[1,128], index: 1, kind: input, shape index: {}]
  %s2 = inlined_call_operand.vmem [shape: f32[1,128], index: 2, kind: input, shape index: {}]
  %s3 = inlined_call_operand.hbm [shape: f32[1,128], index: 3, kind: input, shape index: {}, may-alias: {3,6}]
  %s4 = inlined_call_operand.hbm [shape: f32[1,128], index: 4, kind: input, shape index: {}, may-alias: {4,7}]
  %s5 = inlined_call_operand.hbm [shape: f32[8,128], index: 5, kind: output, shape index: {0}]
  %s6 = inlined_call_operand.hbm [shape: f32[1,128], index: 6, kind: output, shape index: {1}, may-alias: {3,6}]
  %s7 = inlined_call_operand.hbm [shape: f32[1,128], index: 7, kind: output, shape index: {2}, may-alias: {4,7}]
  %8 = xla_tuple %s5, %s6, %s7
  %s9 = sld [smem:[#allocation0]]
  $region54: #{tpu_custom_call.1} parent=0
    _
  %s11 = ssub.s32 1, %s9
  %s12 = scalar_select 0, %s11, %s9
  $region1: #{tpu_custom_call.1} parent=0
    #allocation2 [shape = 'u8[512]{0}', space=vmem, size = 0x400, scoped, tag = 'input window, operand 3, single buffered']
    #allocation3 [shape = 's32[1]{0}', space=sflag, size = 0x4, scoped, tag = 'scoped memory for tpu_custom_call.1']
    #allocation4 [shape = 's32[1]{0}', space=sflag, size = 0x4, scoped, tag = 'scoped memory for tpu_custom_call.1']
    #allocation5 [shape = 'u8[512]{0}', space=vmem, size = 0x400, scoped, tag = 'input window, operand 4, single buffered']
    #allocation6 [shape = 's32[1]{0}', space=sflag, size = 0x4, scoped, tag = 'scoped memory for tpu_custom_call.1']
    #allocation7 [shape = 'u8[4096]{0}', space=vmem, size = 0x1000, scoped, tag = 'output window, operand 0, single buffered']
    #allocation8 [shape = 'u8[512]{0}', space=vmem, size = 0x400, scoped, tag = 'output window, operand 1, single buffered']
    #allocation9 [shape = 's32[1]{0}', space=sflag, size = 0x4, scoped, tag = 'scoped memory for tpu_custom_call.1']
    #allocation10 [shape = 'u8[512]{0}', space=vmem, size = 0x400, scoped, tag = 'output window, operand 2, single buffered']
    %13 = vsyncpa [#allocation3], 0
    %14 = vsyncpa [#allocation6], 0
    %15 = vsyncpa [#allocation4], 0
    %16 = vsyncpa [#allocation9], 0
    // Predicated region
    $region2: #{tpu_custom_call.1} parent=1 // pred_check
      _
    $region3: #{tpu_custom_call.1} parent=1 // pred_check_branch
      %18 = sbr.rel (0) target = $region5
    $region4: #{tpu_custom_call.1} parent=1 // pred_region
      _
    $region5: #{tpu_custom_call.1} parent=1 // pred_fallthru
      _
    // Predicated region
    $region6: #{tpu_custom_call.1} parent=1 // pred_check
      _
    $region7: #{tpu_custom_call.1} parent=1 // pred_check_branch
      %20 = sbr.rel (0) target = $region9
    $region8: #{tpu_custom_call.1} parent=1 // pred_region
      _
    $region9: #{tpu_custom_call.1} parent=1 // pred_fallthru
      _
    // Predicated region
    $region10: #{tpu_custom_call.1} parent=1 // pred_check
      _
    $region11: #{tpu_custom_call.1} parent=1 // pred_check_branch
      %22 = sbr.rel (0) target = $region13
    $region12: #{tpu_custom_call.1} parent=1 // pred_region
      _
    $region13: #{tpu_custom_call.1} parent=1 // pred_fallthru
      _
    // Predicated region
    $region14: #{tpu_custom_call.1} parent=1 // pred_check
      _
    $region15: #{tpu_custom_call.1} parent=1 // pred_check_branch
      %24 = sbr.rel (0) target = $region17
    $region16: #{tpu_custom_call.1} parent=1 // pred_region
      %s26 = ssub.s32 16, 16
      %27 = vsyncadd [#allocation3], %s26
      %s29 = sshll.u32 [#allocation2], 4
      %s30 = int_to_ptr.vmem [resolvable:$true] %s29
      %32 = dma.hbm_to_vmem [thread:$0]  %s3, 16, %s30, [#allocation3]
    $region17: #{tpu_custom_call.1} parent=1 // pred_fallthru
      _
    // Predicated region
    $region18: #{tpu_custom_call.1} parent=1 // pred_check
      _
    $region19: #{tpu_custom_call.1} parent=1 // pred_check_branch
      %34 = sbr.rel (0) target = $region21
    $region20: #{tpu_custom_call.1} parent=1 // pred_region
      %s36 = ssub.s32 16, 16
      %37 = vsyncadd [#allocation6], %s36
      %s39 = sshll.u32 [#allocation5], 4
      %s40 = int_to_ptr.vmem [resolvable:$true] %s39
      %42 = dma.hbm_to_vmem [thread:$0]  %s4, 16, %s40, [#allocation6]
    $region21: #{tpu_custom_call.1} parent=1 // pred_fallthru
      _
    // Predicated region
    $region22: #{tpu_custom_call.1} parent=1 // pred_check
      _
    $region23: #{tpu_custom_call.1} parent=1 // pred_check_branch
      %44 = sbr.rel (0) target = $region25
    $region24: #{tpu_custom_call.1} parent=1 // pred_region
      %45 = dma.done [#allocation3], 16
    $region25: #{tpu_custom_call.1} parent=1 // pred_fallthru
      _
    // Predicated region
    $region26: #{tpu_custom_call.1} parent=1 // pred_check
      _
    $region27: #{tpu_custom_call.1} parent=1 // pred_check_branch
      %47 = sbr.rel (0) target = $region29
    $region28: #{tpu_custom_call.1} parent=1 // pred_region
      %48 = dma.done [#allocation6], 16
    $region29: #{tpu_custom_call.1} parent=1 // pred_fallthru
      _
    %v49 = vld [vmem:[%s0] sm:$0xff]
    %v50 = vld [vmem:[%s1] sm:$0x1]
    %v51 = vld [vmem:[%s2] sm:$0x1]
    %v52 = vld [vmem:[#allocation2] sm:$0x1]
    %v53 = vld [vmem:[#allocation5] sm:$0x1]
    %v54 = vrot.slane %v49, 4
    %v55 = vadd.f32 %v49, %v54
    %v56 = vrot.slane %v55, 2
    %v57 = vadd.f32 %v55, %v56
    %v58 = vrot.slane %v57, 1
    %v59 = vadd.f32 %v57, %v58
    %v60 = vrcp.pop 8.0
    %v61 = vmul.f32 %v59, %v60
    %v62 = vsub.f32 %v49, %v61
    %v63 = vmul.f32 %v62, %v62
    %v64 = vrot.slane %v63, 4
    %v65 = vadd.f32 %v63, %v64
    %v66 = vrot.slane %v65, 2
    %v67 = vadd.f32 %v65, %v66
    %v68 = vrot.slane %v67, 1
    %v69 = vadd.f32 %v67, %v68
    %v70 = vmul.f32 %v69, %v60
    %v71 = vmul.f32 %v52, 0.9
    %v72 = vmul.f32 %v61, 0.1
    %v73 = vadd.f32 %v71, %v72
    %74 = vst [vmem:[#allocation8] sm:$0x1] %v73
    %v75 = vmul.f32 %v53, 0.9
    %v76 = vmul.f32 %v70, 0.1
    %v77 = vadd.f32 %v75, %v76
    %78 = vst [vmem:[#allocation10] sm:$0x1] %v77
    %v79 = vadd.f32 %v70, 1e-05
    %v80 = vrsqrt.pop %v79
    %v81 = vmul.f32 %v50, %v80
    %v82 = vmul.f32 %v61, %v81
    %v83 = vsub.f32 %v51, %v82
    %v85 = vlaneseq
    %v86 = vshrl.u32 %v85, 7
    %v87 = vsub.s32 0, %v86
    %v88 = vrot.slane %v81, %v87
    %v90 = vmul.f32 %v49, %v88
    %v92 = vlaneseq
    %v93 = vshrl.u32 %v92, 7
    %v94 = vsub.s32 0, %v93
    %v95 = vrot.slane %v83, %v94
    %v97 = vadd.f32 %v90, %v95
    %98 = vst [vmem:[#allocation7] sm:$0xff] %v97
    // Predicated region
    $region30: #{tpu_custom_call.1} parent=1 // pred_check
      _
    $region31: #{tpu_custom_call.1} parent=1 // pred_check_branch
      %100 = sbr.rel (0) target = $region33
    $region32: #{tpu_custom_call.1} parent=1 // pred_region
      %s102 = ssub.s32 128, 128
      %103 = vsyncadd [#allocation4], %s102
      %s105 = sshll.u32 [#allocation7], 4
      %s106 = int_to_ptr.vmem [resolvable:$true] %s105
      %108 = dma.vmem_to_hbm [thread:$0]  %s106, 128, %s5, [#allocation4]
    $region33: #{tpu_custom_call.1} parent=1 // pred_fallthru
      _
    // Predicated region
    $region34: #{tpu_custom_call.1} parent=1 // pred_check
      _
    $region35: #{tpu_custom_call.1} parent=1 // pred_check_branch
      %110 = sbr.rel (0) target = $region37
    $region36: #{tpu_custom_call.1} parent=1 // pred_region
      %s112 = ssub.s32 16, 16
      %113 = vsyncadd [#allocation9], %s112
      %s115 = sshll.u32 [#allocation8], 4
      %s116 = int_to_ptr.vmem [resolvable:$true] %s115
      %118 = dma.vmem_to_hbm [thread:$0]  %s116, 16, %s6, [#allocation9]
    $region37: #{tpu_custom_call.1} parent=1 // pred_fallthru
      _
    // Predicated region
    $region38: #{tpu_custom_call.1} parent=1 // pred_check
      _
    $region39: #{tpu_custom_call.1} parent=1 // pred_check_branch
      %120 = sbr.rel (0) target = $region41
    $region40: #{tpu_custom_call.1} parent=1 // pred_region
      %s122 = ssub.s32 16, 16
      %123 = vsyncadd [#allocation9], %s122
      %s125 = sshll.u32 [#allocation10], 4
      %s126 = int_to_ptr.vmem [resolvable:$true] %s125
      %128 = dma.vmem_to_hbm [thread:$0]  %s126, 16, %s7, [#allocation9]
    $region41: #{tpu_custom_call.1} parent=1 // pred_fallthru
      _
    // Predicated region
    $region42: #{tpu_custom_call.1} parent=1 // pred_check
      _
    $region43: #{tpu_custom_call.1} parent=1 // pred_check_branch
      %130 = sbr.rel (0) target = $region45
    $region44: #{tpu_custom_call.1} parent=1 // pred_region
      %131 = dma.done [#allocation4], 128
    $region45: #{tpu_custom_call.1} parent=1 // pred_fallthru
      _
    // Predicated region
    $region46: #{tpu_custom_call.1} parent=1 // pred_check
      _
    $region47: #{tpu_custom_call.1} parent=1 // pred_check_branch
      %133 = sbr.rel (0) target = $region49
    $region48: #{tpu_custom_call.1} parent=1 // pred_region
      %134 = dma.done [#allocation9], 16
    $region49: #{tpu_custom_call.1} parent=1 // pred_fallthru
      _
    // Predicated region
    $region50: #{tpu_custom_call.1} parent=1 // pred_check
      _
    $region51: #{tpu_custom_call.1} parent=1 // pred_check_branch
      %136 = sbr.rel (0) target = $region53
    $region52: #{tpu_custom_call.1} parent=1 // pred_region
      %137 = dma.done [#allocation9], 16
    $region53: #{tpu_custom_call.1} parent=1 // pred_fallthru
      _
    %138 = vsyncpa [#allocation3], 1
    %139 = vsyncpa [#allocation6], 1
    %140 = vsyncpa [#allocation4], 1
    %141 = vsyncpa [#allocation9], 1

</llo_original>
